<compile_context>
chip_gen: v6e
topology: v6e:2x2x1
jax: 0.10.0
libtpu: 0.0.40
codegen_flags: <defaults>
</compile_context>

<pallas_src>
import functools
import math

import jax
import jax.numpy as jnp
from jax.experimental import pallas as pl
from jax.experimental.pallas import tpu as pltpu

EPS = 1e-5     # torch.nn.BatchNorm1d default eps
LANE = 128     # TPU lane width; output / slab are padded to this
SUBLANE = 8    # f32 sublane granularity; every slab segment is 8-row aligned


def _pad_up(n, m):
    return ((n + m - 1) // m) * m


def _mlp_narx_kernel(xf_ref, uf_ref, p_ref, o_ref, *, H, offs):
    """(Linear -> BN(train) -> ReLU) x2 -> Linear, single VMEM block.

    p_ref is one lane-padded (rows, out_pad) parameter slab.  Every segment
    starts at an 8-row-aligned offset, so all slices below are cheap aligned
    views (no sublane relayout before the MXU/VPU).
    Slab rows: [W0x | W0u | gamma0 | beta0 | W1 | gamma1 | beta1 | W2 | b2].
    """
    Fx = xf_ref.shape[1]
    Fu = uf_ref.shape[1]

    w0x = p_ref[offs["w0x"]:offs["w0x"] + Fx, 0:H]
    w0u = p_ref[offs["w0u"]:offs["w0u"] + Fu, 0:H]
    g0 = p_ref[offs["g0"]:offs["g0"] + 1, 0:H]
    be0 = p_ref[offs["be0"]:offs["be0"] + 1, 0:H]
    w1 = p_ref[offs["w1"]:offs["w1"] + H, 0:H]
    g1 = p_ref[offs["g1"]:offs["g1"] + 1, 0:H]
    be1 = p_ref[offs["be1"]:offs["be1"] + 1, 0:H]
    w2 = p_ref[offs["w2"]:offs["w2"] + H, :]
    b2 = p_ref[offs["b2"]:offs["b2"] + 1, :]

    def bn_relu(h, g, beta):
        # BatchNorm1d train mode: biased batch statistics over the batch axis.
        mean = jnp.mean(h, axis=0, keepdims=True)
        var = jnp.mean((h - mean) * (h - mean), axis=0, keepdims=True)
        # Fold the affine into one scale/shift multiply-add; rsqrt -> EUP.
        scale = g * jax.lax.rsqrt(var + EPS)
        shift = beta - mean * scale
        return jnp.maximum(h * scale + shift, 0.0)

    # Layer 0: concat([Xf, Uf], 1) @ W0 folded into two matmuls.  The Linear
    # bias b0 is omitted: BN's mean subtraction cancels it exactly.
    h = (jnp.dot(xf_ref[...], w0x, preferred_element_type=jnp.float32)
         + jnp.dot(uf_ref[...], w0u, preferred_element_type=jnp.float32))
    h = bn_relu(h, g0, be0)

    # Layer 1 (bias b1 likewise cancelled by BN).
    h = jnp.dot(h, w1, preferred_element_type=jnp.float32)
    h = bn_relu(h, g1, be1)

    # Final linear (no BN / activation); lane-dense store into (B, out_pad).
    out = jnp.dot(h, w2, preferred_element_type=jnp.float32) + b2
    o_ref[...] = out.astype(o_ref.dtype)


def mlp_narx_forward(X, U, params):
    """X: (B, Tx, Dx), U: (B, Tu, Du)  ->  (B, output_size)."""
    slab, meta = params
    B = X.shape[0]
    Xf = X.reshape(B, X.shape[1] * X.shape[2]).astype(jnp.float32)
    Uf = U.reshape(B, U.shape[1] * U.shape[2]).astype(jnp.float32)

    out_pad = slab.shape[1]
    vmem = pl.BlockSpec(memory_space=pltpu.MemorySpace.VMEM)
    kernel = functools.partial(
        _mlp_narx_kernel, H=meta["hidden"], offs=meta["offs"])
    out = pl.pallas_call(
        kernel,
        out_shape=jax.ShapeDtypeStruct((B, out_pad), jnp.float32),
        in_specs=[vmem, vmem, vmem],
        out_specs=vmem,
    )(Xf, Uf, slab)
    # Slice the lane-padded output back to the true output width.
    return out[:, :meta["output_size"]]


def init_params(key, Fx, Fu, hidden, output_size):
    """Torch-like init packed into one 8-row-aligned, 128-lane parameter slab.

    Returns (slab, meta).  Slab layout (rows, out_pad), every segment starting
    at an 8-row boundary:
      [W0x(16) | W0u(8) | gamma0(8) | beta0(8) | W1(HP) | gamma1(8) | beta1(8)
       | W2(HP, lane-padded) | b2(8)]
    Weights are stored (in_features, out_features) for row-major MXU matmuls.
    Linear biases b0/b1 are NOT stored: train-mode BatchNorm cancels them.
    """
    H = hidden
    assert H <= LANE, "hidden must fit within one 128-lane tile for this packing"
    FXP = _pad_up(Fx, SUBLANE)
    FUP = _pad_up(Fu, SUBLANE)
    HP = _pad_up(H, SUBLANE)
    out_pad = _pad_up(output_size, LANE)

    offs = {}
    r = 0
    for name, rows in (("w0x", FXP), ("w0u", FUP), ("g0", SUBLANE),
                       ("be0", SUBLANE), ("w1", HP), ("g1", SUBLANE),
                       ("be1", SUBLANE), ("w2", HP), ("b2", SUBLANE)):
        offs[name] = r
        r += rows
    total_rows = _pad_up(r, SUBLANE)

    def uni(k, shape, lo, hi):
        return jax.random.uniform(k, shape, jnp.float32, lo, hi)

    key, k0, k1, k2, kb2, kg0, kbe0, kg1, kbe1 = jax.random.split(key, 9)
    bnd0 = 1.0 / math.sqrt(Fx + Fu)
    bnd1 = 1.0 / math.sqrt(H)
    w0 = uni(k0, (Fx + Fu, H), -bnd0, bnd0)   # rows [0:Fx]->Xf, [Fx:]->Uf
    w1 = uni(k1, (H, H), -bnd1, bnd1)
    w2 = uni(k2, (H, output_size), -bnd1, bnd1)
    b2 = uni(kb2, (output_size,), -bnd1, bnd1)
    g0 = uni(kg0, (H,), 0.5, 1.5)
    be0 = uni(kbe0, (H,), -0.5, 0.5)
    g1 = uni(kg1, (H,), 0.5, 1.5)
    be1 = uni(kbe1, (H,), -0.5, 0.5)

    slab = jnp.zeros((total_rows, out_pad), jnp.float32)
    slab = slab.at[offs["w0x"]:offs["w0x"] + Fx, 0:H].set(w0[:Fx])
    slab = slab.at[offs["w0u"]:offs["w0u"] + Fu, 0:H].set(w0[Fx:])
    slab = slab.at[offs["g0"], 0:H].set(g0)
    slab = slab.at[offs["be0"], 0:H].set(be0)
    slab = slab.at[offs["w1"]:offs["w1"] + H, 0:H].set(w1)
    slab = slab.at[offs["g1"], 0:H].set(g1)
    slab = slab.at[offs["be1"], 0:H].set(be1)
    slab = slab.at[offs["w2"]:offs["w2"] + H, 0:output_size].set(w2)
    slab = slab.at[offs["b2"], 0:output_size].set(b2)

    meta = {"hidden": H, "output_size": output_size, "offs": offs}
    return slab, meta


def _reference_forward(X, U, params):
    """Pure-JAX reference (same math as the PyTorch module in train mode)."""
    slab, meta = params
    H = meta["hidden"]
    offs = meta["offs"]
    ns = meta["output_size"]
    B = X.shape[0]
    xf = X.reshape(B, -1).astype(jnp.float32)
    uf = U.reshape(B, -1).astype(jnp.float32)
    Fx, Fu = xf.shape[1], uf.shape[1]

    w0x = slab[offs["w0x"]:offs["w0x"] + Fx, 0:H]
    w0u = slab[offs["w0u"]:offs["w0u"] + Fu, 0:H]
    g0 = slab[offs["g0"], 0:H]
    be0 = slab[offs["be0"], 0:H]
    w1 = slab[offs["w1"]:offs["w1"] + H, 0:H]
    g1 = slab[offs["g1"], 0:H]
    be1 = slab[offs["be1"], 0:H]
    w2 = slab[offs["w2"]:offs["w2"] + H, 0:ns]
    b2 = slab[offs["b2"], 0:ns]

    def bn_relu(h, g, b):
        m = h.mean(0, keepdims=True)
        v = ((h - m) ** 2).mean(0, keepdims=True)
        return jnp.maximum((h - m) * (g / jnp.sqrt(v + EPS)) + b, 0.0)

    h = xf @ w0x + uf @ w0u
    h = bn_relu(h, g0, be0)
    h = h @ w1
    h = bn_relu(h, g1, be1)
    return h @ w2 + b2


if __name__ == "__main__":
    key = jax.random.PRNGKey(0)
    kX, kU, kP = jax.random.split(key, 3)

    # Small shapes: batch=8, X history (4 steps x 3 states), U history (4 x 2).
    B, Tx, Dx = 8, 4, 3
    Tu, Du = 4, 2
    Fx, Fu = Tx * Dx, Tu * Du        # 12, 8  (input_size = 20)
    hidden = 32                      # 2 hidden layers of 32 neurons
    output_size = Dx                 # 3

    X = jax.random.normal(kX, (B, Tx, Dx), jnp.float32)
    U = jax.random.normal(kU, (B, Tu, Du), jnp.float32)
    params = init_params(kP, Fx, Fu, hidden, output_size)

    out = mlp_narx_forward(X, U, params)
    jax.block_until_ready(out)
    assert out.shape == (B, output_size)

    ref = _reference_forward(X, U, params)
    assert jnp.allclose(out, ref, rtol=1e-3, atol=1e-3), "kernel/ref mismatch"

    print("KERNEL_OK")
</pallas_src>

<mosaic_0001>
module attributes {stable_mosaic.version = 11 : i64} {
  func.func @_mlp_narx_kernel(%arg0: memref<8x12xf32, #tpu.memory_space<vmem>>, %arg1: memref<8x8xf32, #tpu.memory_space<vmem>>, %arg2: memref<128x128xf32, #tpu.memory_space<vmem>>, %arg3: memref<8x128xf32, #tpu.memory_space<vmem>>) attributes {dimension_semantics = [], scalar_prefetch = 0 : i64, scratch_operands = 0 : i64, tpu.core_type = #tpu.core_type<tc>} {
    %c0 = arith.constant 0 : index
    %c0_0 = arith.constant 0 : index
    %0 = vector.load %arg2[%c0, %c0_0] : memref<128x128xf32, #tpu.memory_space<vmem>>, vector<12x32xf32>
    %c16 = arith.constant 16 : index
    %c0_1 = arith.constant 0 : index
    %1 = vector.load %arg2[%c16, %c0_1] : memref<128x128xf32, #tpu.memory_space<vmem>>, vector<8x32xf32>
    %c24 = arith.constant 24 : index
    %c0_2 = arith.constant 0 : index
    %2 = vector.load %arg2[%c24, %c0_2] : memref<128x128xf32, #tpu.memory_space<vmem>>, vector<1x32xf32>
    %c32 = arith.constant 32 : index
    %c0_3 = arith.constant 0 : index
    %3 = vector.load %arg2[%c32, %c0_3] : memref<128x128xf32, #tpu.memory_space<vmem>>, vector<1x32xf32>
    %c40 = arith.constant 40 : index
    %c0_4 = arith.constant 0 : index
    %4 = vector.load %arg2[%c40, %c0_4] : memref<128x128xf32, #tpu.memory_space<vmem>>, vector<32x32xf32>
    %c72 = arith.constant 72 : index
    %c0_5 = arith.constant 0 : index
    %5 = vector.load %arg2[%c72, %c0_5] : memref<128x128xf32, #tpu.memory_space<vmem>>, vector<1x32xf32>
    %c80 = arith.constant 80 : index
    %c0_6 = arith.constant 0 : index
    %6 = vector.load %arg2[%c80, %c0_6] : memref<128x128xf32, #tpu.memory_space<vmem>>, vector<1x32xf32>
    %c88 = arith.constant 88 : index
    %c0_7 = arith.constant 0 : index
    %7 = vector.load %arg2[%c88, %c0_7] : memref<128x128xf32, #tpu.memory_space<vmem>>, vector<32x128xf32>
    %c120 = arith.constant 120 : index
    %c0_8 = arith.constant 0 : index
    %8 = vector.load %arg2[%c120, %c0_8] : memref<128x128xf32, #tpu.memory_space<vmem>>, vector<1x128xf32>
    %c0_9 = arith.constant 0 : index
    %c0_10 = arith.constant 0 : index
    %9 = vector.load %arg0[%c0_9, %c0_10] : memref<8x12xf32, #tpu.memory_space<vmem>>, vector<8x12xf32>
    %cst = arith.constant dense<0.000000e+00> : vector<8x32xf32>
    %10 = tpu.matmul %9, %0, %cst {dimension_numbers = #tpu.dot_dimension_numbers<[1], [0], [0], [1], [0, 0, 1, 1], [], []>} : vector<8x12xf32>, vector<12x32xf32>, vector<8x32xf32> -> vector<8x32xf32>
    %c0_11 = arith.constant 0 : index
    %c0_12 = arith.constant 0 : index
    %11 = vector.load %arg1[%c0_11, %c0_12] : memref<8x8xf32, #tpu.memory_space<vmem>>, vector<8x8xf32>
    %cst_13 = arith.constant dense<0.000000e+00> : vector<8x32xf32>
    %12 = tpu.matmul %11, %1, %cst_13 {dimension_numbers = #tpu.dot_dimension_numbers<[1], [0], [0], [1], [0, 0, 1, 1], [], []>} : vector<8x8xf32>, vector<8x32xf32>, vector<8x32xf32> -> vector<8x32xf32>
    %13 = arith.addf %10, %12 : vector<8x32xf32>
    %cst_14 = arith.constant dense<0.000000e+00> : vector<32xf32>
    %14 = vector.multi_reduction <add>, %13, %cst_14 [0] : vector<8x32xf32> to vector<32xf32>
    %15 = vector.shape_cast %14 : vector<32xf32> to vector<1x32xf32>
    %cst_15 = arith.constant 8.000000e+00 : f32
    %16 = vector.broadcast %cst_15 : f32 to vector<1x32xf32>
    %17 = arith.divf %15, %16 : vector<1x32xf32>
    %18 = vector.broadcast %17 : vector<1x32xf32> to vector<8x32xf32>
    %19 = arith.subf %13, %18 : vector<8x32xf32>
    %20 = vector.broadcast %17 : vector<1x32xf32> to vector<8x32xf32>
    %21 = arith.subf %13, %20 : vector<8x32xf32>
    %22 = arith.mulf %19, %21 : vector<8x32xf32>
    %cst_16 = arith.constant dense<0.000000e+00> : vector<32xf32>
    %23 = vector.multi_reduction <add>, %22, %cst_16 [0] : vector<8x32xf32> to vector<32xf32>
    %24 = vector.shape_cast %23 : vector<32xf32> to vector<1x32xf32>
    %cst_17 = arith.constant 8.000000e+00 : f32
    %25 = vector.broadcast %cst_17 : f32 to vector<1x32xf32>
    %26 = arith.divf %24, %25 : vector<1x32xf32>
    %cst_18 = arith.constant 9.99999974E-6 : f32
    %27 = vector.broadcast %cst_18 : f32 to vector<1x32xf32>
    %28 = arith.addf %26, %27 : vector<1x32xf32>
    %29 = math.rsqrt %28 : vector<1x32xf32>
    %30 = arith.mulf %2, %29 : vector<1x32xf32>
    %31 = arith.mulf %17, %30 : vector<1x32xf32>
    %32 = arith.subf %3, %31 : vector<1x32xf32>
    %33 = vector.broadcast %30 : vector<1x32xf32> to vector<8x32xf32>
    %34 = arith.mulf %13, %33 : vector<8x32xf32>
    %35 = vector.broadcast %32 : vector<1x32xf32> to vector<8x32xf32>
    %36 = arith.addf %34, %35 : vector<8x32xf32>
    %cst_19 = arith.constant 0.000000e+00 : f32
    %37 = vector.broadcast %cst_19 : f32 to vector<8x32xf32>
    %38 = arith.maximumf %36, %37 : vector<8x32xf32>
    %cst_20 = arith.constant dense<0.000000e+00> : vector<8x32xf32>
    %39 = tpu.matmul %38, %4, %cst_20 {dimension_numbers = #tpu.dot_dimension_numbers<[1], [0], [0], [1], [0, 0, 1, 1], [], []>} : vector<8x32xf32>, vector<32x32xf32>, vector<8x32xf32> -> vector<8x32xf32>
    %cst_21 = arith.constant dense<0.000000e+00> : vector<32xf32>
    %40 = vector.multi_reduction <add>, %39, %cst_21 [0] : vector<8x32xf32> to vector<32xf32>
    %41 = vector.shape_cast %40 : vector<32xf32> to vector<1x32xf32>
    %cst_22 = arith.constant 8.000000e+00 : f32
    %42 = vector.broadcast %cst_22 : f32 to vector<1x32xf32>
    %43 = arith.divf %41, %42 : vector<1x32xf32>
    %44 = vector.broadcast %43 : vector<1x32xf32> to vector<8x32xf32>
    %45 = arith.subf %39, %44 : vector<8x32xf32>
    %46 = vector.broadcast %43 : vector<1x32xf32> to vector<8x32xf32>
    %47 = arith.subf %39, %46 : vector<8x32xf32>
    %48 = arith.mulf %45, %47 : vector<8x32xf32>
    %cst_23 = arith.constant dense<0.000000e+00> : vector<32xf32>
    %49 = vector.multi_reduction <add>, %48, %cst_23 [0] : vector<8x32xf32> to vector<32xf32>
    %50 = vector.shape_cast %49 : vector<32xf32> to vector<1x32xf32>
    %cst_24 = arith.constant 8.000000e+00 : f32
    %51 = vector.broadcast %cst_24 : f32 to vector<1x32xf32>
    %52 = arith.divf %50, %51 : vector<1x32xf32>
    %cst_25 = arith.constant 9.99999974E-6 : f32
    %53 = vector.broadcast %cst_25 : f32 to vector<1x32xf32>
    %54 = arith.addf %52, %53 : vector<1x32xf32>
    %55 = math.rsqrt %54 : vector<1x32xf32>
    %56 = arith.mulf %5, %55 : vector<1x32xf32>
    %57 = arith.mulf %43, %56 : vector<1x32xf32>
    %58 = arith.subf %6, %57 : vector<1x32xf32>
    %59 = vector.broadcast %56 : vector<1x32xf32> to vector<8x32xf32>
    %60 = arith.mulf %39, %59 : vector<8x32xf32>
    %61 = vector.broadcast %58 : vector<1x32xf32> to vector<8x32xf32>
    %62 = arith.addf %60, %61 : vector<8x32xf32>
    %cst_26 = arith.constant 0.000000e+00 : f32
    %63 = vector.broadcast %cst_26 : f32 to vector<8x32xf32>
    %64 = arith.maximumf %62, %63 : vector<8x32xf32>
    %cst_27 = arith.constant dense<0.000000e+00> : vector<8x128xf32>
    %65 = tpu.matmul %64, %7, %cst_27 {dimension_numbers = #tpu.dot_dimension_numbers<[1], [0], [0], [1], [0, 0, 1, 1], [], []>} : vector<8x32xf32>, vector<32x128xf32>, vector<8x128xf32> -> vector<8x128xf32>
    %66 = vector.broadcast %8 : vector<1x128xf32> to vector<8x128xf32>
    %67 = arith.addf %65, %66 : vector<8x128xf32>
    %c0_28 = arith.constant 0 : index
    %c0_29 = arith.constant 0 : index
    %68 = vector.load %arg3[%c0_28, %c0_29] : memref<8x128xf32, #tpu.memory_space<vmem>>, vector<8x128xf32>
    tpu.vector_store %arg3[%c0_28, %c0_29], %67 {strides = array<i32>} : memref<8x128xf32, #tpu.memory_space<vmem>>, vector<8x128xf32>,
    return
  }
}

</mosaic_0001>

<llo_original>
// kernel: tpu_custom_call.1
$region0: #{tpu_custom_call.1}
  #allocation0 [shape = 'u32[]', space=smem, size = 0x4, offset = 0x4, fixed_abs, tag = 'smem constant byte address 0x4 - core index']
  #allocation1 [shape = 'u32[144,128]{1,0:T(1,128)}', space=vmem, size = 0x12000, scoped, tag = 'internal scratch']
  %s0 = inlined_call_operand.hbm [shape: f32[8,12], index: 0, kind: input, shape index: {}]
  %s1 = inlined_call_operand.hbm [shape: f32[8,8], index: 1, kind: input, shape index: {}]
  %s2 = inlined_call_operand.hbm [shape: f32[128,128], index: 2, kind: input, shape index: {}]
  %s3 = inlined_call_operand.hbm [shape: f32[8,128], index: 3, kind: output, shape index: {}]
  %s4 = sld [smem:[#allocation0]]
  $region34: #{tpu_custom_call.1} parent=0
    _
  %s6 = ssub.s32 1, %s4
  %s7 = scalar_select 0, %s6, %s4
  $region1: #{tpu_custom_call.1} parent=0
    #allocation2 [shape = 'u8[4096]{0}', space=vmem, size = 0x1000, scoped, tag = 'input window, operand 0, single buffered']
    #allocation3 [shape = 's32[1]{0}', space=sflag, size = 0x4, scoped, tag = 'scoped memory for tpu_custom_call.1']
    #allocation4 [shape = 's32[1]{0}', space=sflag, size = 0x4, scoped, tag = 'scoped memory for tpu_custom_call.1']
    #allocation5 [shape = 'u8[4096]{0}', space=vmem, size = 0x1000, scoped, tag = 'input window, operand 1, single buffered']
    #allocation6 [shape = 's32[1]{0}', space=sflag, size = 0x4, scoped, tag = 'scoped memory for tpu_custom_call.1']
    #allocation7 [shape = 'u8[65536]{0}', space=vmem, size = 0x10000, scoped, tag = 'input window, operand 2, single buffered']
    #allocation8 [shape = 'u8[4096]{0}', space=vmem, size = 0x1000, scoped, tag = 'output window, operand 0, single buffered']
    %8 = vsyncpa [#allocation3], 0
    %9 = vsyncpa [#allocation6], 0
    %10 = vsyncpa [#allocation4], 0
    // Predicated region
    $region2: #{tpu_custom_call.1} parent=1 // pred_check
      _
    $region3: #{tpu_custom_call.1} parent=1 // pred_check_branch
      %12 = sbr.rel (0) target = $region5
    $region4: #{tpu_custom_call.1} parent=1 // pred_region
      %s14 = ssub.s32 128, 128
      %15 = vsyncadd [#allocation3], %s14
      %s17 = sshll.u32 [#allocation2], 4
      %s18 = int_to_ptr.vmem [resolvable:$true] %s17
      %20 = dma.hbm_to_vmem [thread:$0]  %s0, 128, %s18, [#allocation3]
    $region5: #{tpu_custom_call.1} parent=1 // pred_fallthru
      _
    // Predicated region
    $region6: #{tpu_custom_call.1} parent=1 // pred_check
      _
    $region7: #{tpu_custom_call.1} parent=1 // pred_check_branch
      %22 = sbr.rel (0) target = $region9
    $region8: #{tpu_custom_call.1} parent=1 // pred_region
      %s24 = ssub.s32 128, 128
      %25 = vsyncadd [#allocation6], %s24
      %s27 = sshll.u32 [#allocation5], 4
      %s28 = int_to_ptr.vmem [resolvable:$true] %s27
      %30 = dma.hbm_to_vmem [thread:$0]  %s1, 128, %s28, [#allocation6]
    $region9: #{tpu_custom_call.1} parent=1 // pred_fallthru
      _
    // Predicated region
    $region10: #{tpu_custom_call.1} parent=1 // pred_check
      _
    $region11: #{tpu_custom_call.1} parent=1 // pred_check_branch
      %32 = sbr.rel (0) target = $region13
    $region12: #{tpu_custom_call.1} parent=1 // pred_region
      %s34 = ssub.s32 2048, 2048
      %35 = vsyncadd [#allocation6], %s34
      %s36 = sshll.u32 [#allocation7], 4
      %s37 = int_to_ptr.vmem [resolvable:$true] %s36
      %42 = dma.hbm_to_vmem [thread:$0]  %s2, 2048, %s37, [#allocation6], 128, 128, 8
    $region13: #{tpu_custom_call.1} parent=1 // pred_fallthru
      _
    // Predicated region
    $region14: #{tpu_custom_call.1} parent=1 // pred_check
      _
    $region15: #{tpu_custom_call.1} parent=1 // pred_check_branch
      %44 = sbr.rel (0) target = $region17
    $region16: #{tpu_custom_call.1} parent=1 // pred_region
      %45 = dma.done [#allocation3], 128
    $region17: #{tpu_custom_call.1} parent=1 // pred_fallthru
      _
    // Predicated region
    $region18: #{tpu_custom_call.1} parent=1 // pred_check
      _
    $region19: #{tpu_custom_call.1} parent=1 // pred_check_branch
      %47 = sbr.rel (0) target = $region21
    $region20: #{tpu_custom_call.1} parent=1 // pred_region
      %48 = dma.done [#allocation6], 128
    $region21: #{tpu_custom_call.1} parent=1 // pred_fallthru
      _
    // Predicated region
    $region22: #{tpu_custom_call.1} parent=1 // pred_check
      _
    $region23: #{tpu_custom_call.1} parent=1 // pred_check_branch
      %50 = sbr.rel (0) target = $region25
    $region24: #{tpu_custom_call.1} parent=1 // pred_region
      %51 = dma.done [#allocation6], 2048
    $region25: #{tpu_custom_call.1} parent=1 // pred_fallthru
      _
    %v52 = vld [vmem:[#allocation7] sm:$0xff]
    %v53 = vld [vmem:[#allocation7 + $0x8] sm:$0xf]
    %v54 = vld [vmem:[#allocation7 + $0x10] sm:$0xff]
    %v55 = vld [vmem:[#allocation7 + $0x18] sm:$0x1]
    %v56 = vld [vmem:[#allocation7 + $0x20] sm:$0x1]
    %v57 = vld [vmem:[#allocation7 + $0x28] sm:$0xff]
    %v58 = vld [vmem:[#allocation7 + $0x30] sm:$0xff]
    %v59 = vld [vmem:[#allocation7 + $0x38] sm:$0xff]
    %v60 = vld [vmem:[#allocation7 + $0x40] sm:$0xff]
    %v61 = vld [vmem:[#allocation7 + $0x48] sm:$0x1]
    %v62 = vld [vmem:[#allocation7 + $0x50] sm:$0x1]
    %v63 = vld [vmem:[#allocation7 + $0x58] sm:$0xff]
    %v64 = vld [vmem:[#allocation7 + $0x60] sm:$0xff]
    %v65 = vld [vmem:[#allocation7 + $0x68] sm:$0xff]
    %v66 = vld [vmem:[#allocation7 + $0x70] sm:$0xff]
    %v67 = vld [vmem:[#allocation7 + $0x78] sm:$0x1]
    %v68 = vld [vmem:[#allocation2] sm:$0xff]
    %v69 = vld [vmem:[#allocation5] sm:$0xff]
    %vm70 = vcmask 64512
    %v72 = vsel %vm70, %v69, 0
    %74 = vmatprep.subr.mxu0 0.0
    %75 = vmatpush1.msra.mxu0 0.0
    %76 = vmatprep.subr.mxu0 0.0
    %77 = vmatpush1.msra.mxu0 0.0
    %78 = vmatprep.subr.mxu0 0.0
    %79 = vmatpush1.msra.mxu0 0.0
    %80 = vmatprep.subr.mxu0 0.0
    %81 = vmatpush1.msra.mxu0 0.0
    %82 = vmatprep.subr.mxu0 0.0
    %83 = vmatpush1.msra.mxu0 0.0
    %84 = vmatprep.subr.mxu0 0.0
    %85 = vmatpush1.msra.mxu0 0.0
    %86 = vmatprep.subr.mxu0 0.0
    %87 = vmatpush1.msra.mxu0 0.0
    %88 = vmatprep.subr.mxu0 0.0
    %89 = vmatpush1.msra.mxu0 0.0
    %90 = vmatprep.subr.mxu0 0.0
    %91 = vmatpush1.msra.mxu0 0.0
    %92 = vmatprep.subr.mxu0 0.0
    %93 = vmatpush1.msra.mxu0 0.0
    %94 = vmatprep.subr.mxu0 0.0
    %95 = vmatpush1.msra.mxu0 0.0
    %96 = vmatprep.subr.mxu0 0.0
    %97 = vmatpush1.msra.mxu0 0.0
    %98 = vmatprep.subr.mxu0 0.0
    %99 = vmatpush1.msra.mxu0 0.0
    %100 = vmatprep.subr.mxu0 0.0
    %101 = vmatpush1.msra.mxu0 0.0
    %102 = vmatprep.subr.mxu0 0.0
    %103 = vmatpush1.msra.mxu0 0.0
    %104 = vmatprep.subr.mxu0 0.0
    %105 = vmatpush1.msra.mxu0 %v54
    %106 = vmatprep.subr.mxu0 0.0
    %107 = vmatpush2.msra.mxu0 0.0
    %108 = vmatprep.subr.mxu0 0.0
    %109 = vmatpush2.msra.mxu0 0.0
    %110 = vmatprep.subr.mxu0 0.0
    %111 = vmatpush2.msra.mxu0 0.0
    %112 = vmatprep.subr.mxu0 0.0
    %113 = vmatpush2.msra.mxu0 0.0
    %114 = vmatprep.subr.mxu0 0.0
    %115 = vmatpush2.msra.mxu0 0.0
    %116 = vmatprep.subr.mxu0 0.0
    %117 = vmatpush2.msra.mxu0 0.0
    %118 = vmatprep.subr.mxu0 0.0
    %119 = vmatpush2.msra.mxu0 0.0
    %120 = vmatprep.subr.mxu0 0.0
    %121 = vmatpush2.msra.mxu0 0.0
    %122 = vmatprep.subr.mxu0 0.0
    %123 = vmatpush2.msra.mxu0 0.0
    %124 = vmatprep.subr.mxu0 0.0
    %125 = vmatpush2.msra.mxu0 0.0
    %126 = vmatprep.subr.mxu0 0.0
    %127 = vmatpush2.msra.mxu0 0.0
    %128 = vmatprep.subr.mxu0 0.0
    %129 = vmatpush2.msra.mxu0 0.0
    %130 = vmatprep.subr.mxu0 0.0
    %131 = vmatpush2.msra.mxu0 0.0
    %132 = vmatprep.subr.mxu0 0.0
    %133 = vmatpush2.msra.mxu0 0.0
    %134 = vmatprep.subr.mxu0 0.0
    %135 = vmatpush2.msra.mxu0 0.0
    %136 = vmatprep.subr.mxu0 0.0
    %137 = vmatpush2.msra.mxu0 0.0
    %138 = vmatprep.mubr.f32.mxu0 0.0
    %139 = vmatmul.mubr.f32.gmra.mxu0 %v72
    %v140 = vpop.f32.mrf.mxu0
    %v141 = vadd.f32 0.0, %v140
    %v142 = vpop.f32.mrf.mxu0
    %143 = vdwg.mxu0
    %vm144 = vcmask 97280
    %v146 = vsel %vm144, %v68, 0
    %vm148 = vcmask 1043456
    %v150 = vsel %vm148, %v53, 0
    %152 = vmatprep.subr.mxu0 0.0
    %153 = vmatpush1.msra.mxu0 0.0
    %154 = vmatprep.subr.mxu0 0.0
    %155 = vmatpush1.msra.mxu0 0.0
    %156 = vmatprep.subr.mxu0 0.0
    %157 = vmatpush1.msra.mxu0 0.0
    %158 = vmatprep.subr.mxu0 0.0
    %159 = vmatpush1.msra.mxu0 0.0
    %160 = vmatprep.subr.mxu0 0.0
    %161 = vmatpush1.msra.mxu0 0.0
    %162 = vmatprep.subr.mxu0 0.0
    %163 = vmatpush1.msra.mxu0 0.0
    %164 = vmatprep.subr.mxu0 0.0
    %165 = vmatpush1.msra.mxu0 0.0
    %166 = vmatprep.subr.mxu0 0.0
    %167 = vmatpush1.msra.mxu0 0.0
    %168 = vmatprep.subr.mxu0 0.0
    %169 = vmatpush1.msra.mxu0 0.0
    %170 = vmatprep.subr.mxu0 0.0
    %171 = vmatpush1.msra.mxu0 0.0
    %172 = vmatprep.subr.mxu0 0.0
    %173 = vmatpush1.msra.mxu0 0.0
    %174 = vmatprep.subr.mxu0 0.0
    %175 = vmatpush1.msra.mxu0 0.0
    %176 = vmatprep.subr.mxu0 0.0
    %177 = vmatpush1.msra.mxu0 0.0
    %178 = vmatprep.subr.mxu0 0.0
    %179 = vmatpush1.msra.mxu0 0.0
    %180 = vmatprep.subr.mxu0 0.0
    %181 = vmatpush1.msra.mxu0 %v150
    %182 = vmatprep.subr.mxu0 0.0
    %183 = vmatpush1.msra.mxu0 %v52
    %184 = vmatprep.subr.mxu0 0.0
    %185 = vmatpush2.msra.mxu0 0.0
    %186 = vmatprep.subr.mxu0 0.0
    %187 = vmatpush2.msra.mxu0 0.0
    %188 = vmatprep.subr.mxu0 0.0
    %189 = vmatpush2.msra.mxu0 0.0
    %190 = vmatprep.subr.mxu0 0.0
    %191 = vmatpush2.msra.mxu0 0.0
    %192 = vmatprep.subr.mxu0 0.0
    %193 = vmatpush2.msra.mxu0 0.0
    %194 = vmatprep.subr.mxu0 0.0
    %195 = vmatpush2.msra.mxu0 0.0
    %196 = vmatprep.subr.mxu0 0.0
    %197 = vmatpush2.msra.mxu0 0.0
    %198 = vmatprep.subr.mxu0 0.0
    %199 = vmatpush2.msra.mxu0 0.0
    %200 = vmatprep.subr.mxu0 0.0
    %201 = vmatpush2.msra.mxu0 0.0
    %202 = vmatprep.subr.mxu0 0.0
    %203 = vmatpush2.msra.mxu0 0.0
    %204 = vmatprep.subr.mxu0 0.0
    %205 = vmatpush2.msra.mxu0 0.0
    %206 = vmatprep.subr.mxu0 0.0
    %207 = vmatpush2.msra.mxu0 0.0
    %208 = vmatprep.subr.mxu0 0.0
    %209 = vmatpush2.msra.mxu0 0.0
    %210 = vmatprep.subr.mxu0 0.0
    %211 = vmatpush2.msra.mxu0 0.0
    %212 = vmatprep.subr.mxu0 0.0
    %213 = vmatpush2.msra.mxu0 0.0
    %214 = vmatprep.subr.mxu0 0.0
    %215 = vmatpush2.msra.mxu0 0.0
    %216 = vmatprep.mubr.f32.mxu0 0.0
    %217 = vmatmul.mubr.f32.gmra.mxu0 %v146
    %v218 = vpop.f32.mrf.mxu0
    %v219 = vadd.f32 %v141, %v218
    %v220 = vpop.f32.mrf.mxu0
    %221 = vdwg.mxu0
    %vm222 = vcmask 261120
    %v223 = vsel %vm222, %v219, 0.0
    %v224 = vrot.slane %v223, 4
    %v225 = vadd.f32 %v223, %v224
    %v226 = vrot.slane %v225, 2
    %v227 = vadd.f32 %v225, %v226
    %v228 = vrot.slane %v227, 1
    %v229 = vadd.f32 %v227, %v228
    %v230 = vrcp.pop 8.0
    %v231 = vmul.f32 %v229, %v230
    %v232 = vsub.f32 %v219, %v231
    %v233 = vmul.f32 %v232, %v232
    %v234 = vsel %vm222, %v233, 0.0
    %v235 = vrot.slane %v234, 4
    %v236 = vadd.f32 %v234, %v235
    %v237 = vrot.slane %v236, 2
    %v238 = vadd.f32 %v236, %v237
    %v239 = vrot.slane %v238, 1
    %v240 = vadd.f32 %v238, %v239
    %v241 = vmul.f32 %v240, %v230
    %v242 = vadd.f32 %v241, 1e-05
    %v243 = vrsqrt.pop %v242
    %v244 = vmul.f32 %v55, %v243
    %v245 = vmul.f32 %v231, %v244
    %v246 = vsub.f32 %v56, %v245
    %v247 = vlaneseq
    %v248 = vshrl.u32 %v247, 7
    %v249 = vsub.s32 0, %v248
    %v250 = vrot.slane %v244, %v249
    %v251 = vmul.f32 %v219, %v250
    %v252 = vlaneseq
    %v253 = vshrl.u32 %v252, 7
    %v254 = vsub.s32 0, %v253
    %v255 = vrot.slane %v246, %v254
    %v256 = vadd.f32 %v251, %v255
    %v257 = vmax.f32 %v256, 0.0
    %v259 = vsel %vm222, %v257, 0
    %261 = vmatprep.subr.mxu0 0.0
    %262 = vmatpush1.msra.mxu0 0.0
    %263 = vmatprep.subr.mxu0 0.0
    %264 = vmatpush1.msra.mxu0 0.0
    %265 = vmatprep.subr.mxu0 0.0
    %266 = vmatpush1.msra.mxu0 0.0
    %267 = vmatprep.subr.mxu0 0.0
    %268 = vmatpush1.msra.mxu0 0.0
    %269 = vmatprep.subr.mxu0 0.0
    %270 = vmatpush1.msra.mxu0 0.0
    %271 = vmatprep.subr.mxu0 0.0
    %272 = vmatpush1.msra.mxu0 0.0
    %273 = vmatprep.subr.mxu0 0.0
    %274 = vmatpush1.msra.mxu0 0.0
    %275 = vmatprep.subr.mxu0 0.0
    %276 = vmatpush1.msra.mxu0 0.0
    %277 = vmatprep.subr.mxu0 0.0
    %278 = vmatpush1.msra.mxu0 0.0
    %279 = vmatprep.subr.mxu0 0.0
    %280 = vmatpush1.msra.mxu0 0.0
    %281 = vmatprep.subr.mxu0 0.0
    %282 = vmatpush1.msra.mxu0 0.0
    %283 = vmatprep.subr.mxu0 0.0
    %284 = vmatpush1.msra.mxu0 0.0
    %285 = vmatprep.subr.mxu0 0.0
    %286 = vmatpush1.msra.mxu0 %v60
    %287 = vmatprep.subr.mxu0 0.0
    %288 = vmatpush1.msra.mxu0 %v59
    %289 = vmatprep.subr.mxu0 0.0
    %290 = vmatpush1.msra.mxu0 %v58
    %291 = vmatprep.subr.mxu0 0.0
    %292 = vmatpush1.msra.mxu0 %v57
    %293 = vmatprep.subr.mxu0 0.0
    %294 = vmatpush2.msra.mxu0 0.0
    %295 = vmatprep.subr.mxu0 0.0
    %296 = vmatpush2.msra.mxu0 0.0
    %297 = vmatprep.subr.mxu0 0.0
    %298 = vmatpush2.msra.mxu0 0.0
    %299 = vmatprep.subr.mxu0 0.0
    %300 = vmatpush2.msra.mxu0 0.0
    %301 = vmatprep.subr.mxu0 0.0
    %302 = vmatpush2.msra.mxu0 0.0
    %303 = vmatprep.subr.mxu0 0.0
    %304 = vmatpush2.msra.mxu0 0.0
    %305 = vmatprep.subr.mxu0 0.0
    %306 = vmatpush2.msra.mxu0 0.0
    %307 = vmatprep.subr.mxu0 0.0
    %308 = vmatpush2.msra.mxu0 0.0
    %309 = vmatprep.subr.mxu0 0.0
    %310 = vmatpush2.msra.mxu0 0.0
    %311 = vmatprep.subr.mxu0 0.0
    %312 = vmatpush2.msra.mxu0 0.0
    %313 = vmatprep.subr.mxu0 0.0
    %314 = vmatpush2.msra.mxu0 0.0
    %315 = vmatprep.subr.mxu0 0.0
    %316 = vmatpush2.msra.mxu0 0.0
    %317 = vmatprep.subr.mxu0 0.0
    %318 = vmatpush2.msra.mxu0 0.0
    %319 = vmatprep.subr.mxu0 0.0
    %320 = vmatpush2.msra.mxu0 0.0
    %321 = vmatprep.subr.mxu0 0.0
    %322 = vmatpush2.msra.mxu0 0.0
    %323 = vmatprep.subr.mxu0 0.0
    %324 = vmatpush2.msra.mxu0 0.0
    %325 = vmatprep.mubr.f32.mxu0 0.0
    %326 = vmatmul.mubr.f32.gmra.mxu0 %v259
    %v327 = vpop.f32.mrf.mxu0
    %v328 = vadd.f32 0.0, %v327
    %v329 = vpop.f32.mrf.mxu0
    %330 = vdwg.mxu0
    %v331 = vsel %vm222, %v328, 0.0
    %v332 = vrot.slane %v331, 4
    %v333 = vadd.f32 %v331, %v332
    %v334 = vrot.slane %v333, 2
    %v335 = vadd.f32 %v333, %v334
    %v336 = vrot.slane %v335, 1
    %v337 = vadd.f32 %v335, %v336
    %v338 = vmul.f32 %v337, %v230
    %v339 = vsub.f32 %v328, %v338
    %v340 = vmul.f32 %v339, %v339
    %v341 = vsel %vm222, %v340, 0.0
    %v342 = vrot.slane %v341, 4
    %v343 = vadd.f32 %v341, %v342
    %v344 = vrot.slane %v343, 2
    %v345 = vadd.f32 %v343, %v344
    %v346 = vrot.slane %v345, 1
    %v347 = vadd.f32 %v345, %v346
    %v348 = vmul.f32 %v347, %v230
    %v349 = vadd.f32 %v348, 1e-05
    %v350 = vrsqrt.pop %v349
    %v351 = vmul.f32 %v61, %v350
    %v352 = vmul.f32 %v338, %v351
    %v353 = vsub.f32 %v62, %v352
    %v354 = vlaneseq
    %v355 = vshrl.u32 %v354, 7
    %v356 = vsub.s32 0, %v355
    %v357 = vrot.slane %v351, %v356
    %v358 = vmul.f32 %v328, %v357
    %v359 = vlaneseq
    %v360 = vshrl.u32 %v359, 7
    %v361 = vsub.s32 0, %v360
    %v362 = vrot.slane %v353, %v361
    %v363 = vadd.f32 %v358, %v362
    %v364 = vmax.f32 %v363, 0.0
    %v365 = vlaneseq
    %v366 = vshrl.u32 %v365, 7
    %v367 = vsub.s32 0, %v366
    %v368 = vrot.slane %v67, %v367
    %v370 = vsel %vm222, %v364, 0
    %372 = vmatprep.subr.mxu0 0.0
    %373 = vmatpush1.msra.mxu0 0.0
    %374 = vmatprep.subr.mxu0 0.0
    %375 = vmatpush1.msra.mxu0 0.0
    %376 = vmatprep.subr.mxu0 0.0
    %377 = vmatpush1.msra.mxu0 0.0
    %378 = vmatprep.subr.mxu0 0.0
    %379 = vmatpush1.msra.mxu0 0.0
    %380 = vmatprep.subr.mxu0 0.0
    %381 = vmatpush1.msra.mxu0 0.0
    %382 = vmatprep.subr.mxu0 0.0
    %383 = vmatpush1.msra.mxu0 0.0
    %384 = vmatprep.subr.mxu0 0.0
    %385 = vmatpush1.msra.mxu0 0.0
    %386 = vmatprep.subr.mxu0 0.0
    %387 = vmatpush1.msra.mxu0 0.0
    %388 = vmatprep.subr.mxu0 0.0
    %389 = vmatpush1.msra.mxu0 0.0
    %390 = vmatprep.subr.mxu0 0.0
    %391 = vmatpush1.msra.mxu0 0.0
    %392 = vmatprep.subr.mxu0 0.0
    %393 = vmatpush1.msra.mxu0 0.0
    %394 = vmatprep.subr.mxu0 0.0
    %395 = vmatpush1.msra.mxu0 0.0
    %396 = vmatprep.subr.mxu0 0.0
    %397 = vmatpush1.msra.mxu0 %v66
    %398 = vmatprep.subr.mxu0 0.0
    %399 = vmatpush1.msra.mxu0 %v65
    %400 = vmatprep.subr.mxu0 0.0
    %401 = vmatpush1.msra.mxu0 %v64
    %402 = vmatprep.subr.mxu0 0.0
    %403 = vmatpush1.msra.mxu0 %v63
    %404 = vmatprep.subr.mxu0 0.0
    %405 = vmatpush2.msra.mxu0 0.0
    %406 = vmatprep.subr.mxu0 0.0
    %407 = vmatpush2.msra.mxu0 0.0
    %408 = vmatprep.subr.mxu0 0.0
    %409 = vmatpush2.msra.mxu0 0.0
    %410 = vmatprep.subr.mxu0 0.0
    %411 = vmatpush2.msra.mxu0 0.0
    %412 = vmatprep.subr.mxu0 0.0
    %413 = vmatpush2.msra.mxu0 0.0
    %414 = vmatprep.subr.mxu0 0.0
    %415 = vmatpush2.msra.mxu0 0.0
    %416 = vmatprep.subr.mxu0 0.0
    %417 = vmatpush2.msra.mxu0 0.0
    %418 = vmatprep.subr.mxu0 0.0
    %419 = vmatpush2.msra.mxu0 0.0
    %420 = vmatprep.subr.mxu0 0.0
    %421 = vmatpush2.msra.mxu0 0.0
    %422 = vmatprep.subr.mxu0 0.0
    %423 = vmatpush2.msra.mxu0 0.0
    %424 = vmatprep.subr.mxu0 0.0
    %425 = vmatpush2.msra.mxu0 0.0
    %426 = vmatprep.subr.mxu0 0.0
    %427 = vmatpush2.msra.mxu0 0.0
    %428 = vmatprep.subr.mxu0 0.0
    %429 = vmatpush2.msra.mxu0 0.0
    %430 = vmatprep.subr.mxu0 0.0
    %431 = vmatpush2.msra.mxu0 0.0
    %432 = vmatprep.subr.mxu0 0.0
    %433 = vmatpush2.msra.mxu0 0.0
    %434 = vmatprep.subr.mxu0 0.0
    %435 = vmatpush2.msra.mxu0 0.0
    %436 = vmatprep.mubr.f32.mxu0 0.0
    %437 = vmatmul.mubr.f32.gmra.mxu0 %v370
    %v438 = vpop.f32.mrf.mxu0
    %v439 = vadd.f32 %v368, %v438
    %v440 = vpop.f32.mrf.mxu0
    %441 = vdwg.mxu0
    %442 = vst [vmem:[#allocation8] sm:$0xff] %v439
    // Predicated region
    $region26: #{tpu_custom_call.1} parent=1 // pred_check
      _
    $region27: #{tpu_custom_call.1} parent=1 // pred_check_branch
      %444 = sbr.rel (0) target = $region29
    $region28: #{tpu_custom_call.1} parent=1 // pred_region
      %s446 = ssub.s32 128, 128
      %447 = vsyncadd [#allocation4], %s446
      %s449 = sshll.u32 [#allocation8], 4
      %s450 = int_to_ptr.vmem [resolvable:$true] %s449
      %452 = dma.vmem_to_hbm [thread:$0]  %s450, 128, %s3, [#allocation4]
    $region29: #{tpu_custom_call.1} parent=1 // pred_fallthru
      _
    // Predicated region
    $region30: #{tpu_custom_call.1} parent=1 // pred_check
      _
    $region31: #{tpu_custom_call.1} parent=1 // pred_check_branch
      %454 = sbr.rel (0) target = $region33
    $region32: #{tpu_custom_call.1} parent=1 // pred_region
      %455 = dma.done [#allocation4], 128
    $region33: #{tpu_custom_call.1} parent=1 // pred_fallthru
      _
    %456 = vsyncpa [#allocation3], 1
    %457 = vsyncpa [#allocation6], 1
    %458 = vsyncpa [#allocation4], 1

</llo_original>
